<compile_context>
chip_gen: v5e
topology: v5e:2x2
jax: 0.10.0
libtpu: 0.0.40
codegen_flags: <defaults>
</compile_context>

<pallas_src>
import jax
import jax.numpy as jnp
from jax.experimental import pallas as pl
from jax.experimental.pallas import tpu as pltpu

KH, KW = 3, 3          # nn.Conv2d(1, 1, 3) kernel size
LANE = 128             # TPU lane width
VMEM_BLOCK_BUDGET = 4 * 1024 * 1024    # bytes for double-buffered in+out blocks


def conv3x3_plus1_kernel(w_ref, b_ref, x_ref, o_ref):
    """3x3 valid conv + (bias + 1) on a batch tile.

    w_ref: (9,)  f32 SMEM   flattened 3x3 conv weight
    b_ref: (1,)  f32 SMEM   bias + 1.0 (folded in the wrapper)
    x_ref: (TB, H, Wp)  f32 VMEM, Wp a multiple of 128
    o_ref: (TB, Ho, Wp) f32 VMEM, Ho = H - 2; columns >= Wo are padding
           (garbage, sliced away by the wrapper) so every store is lane-dense.
    """
    ho = o_ref.shape[1]
    wp = x_ref.shape[2]

    x = x_ref[...]  # f32, loaded once; no per-tap casts
    # Column (lane) shifts via the XLU.  Circular wrap only pollutes the last
    # one/two padded columns (>= Wp - 2 >= Wo), which the wrapper discards.
    x_sh = (
        x,
        pltpu.roll(x, shift=wp - 1, axis=2),   # x[..., j+1]
        pltpu.roll(x, shift=wp - 2, axis=2),   # x[..., j+2]
    )

    # Seed accumulator with the (0,0) tap and the folded (bias + 1); then add
    # the remaining 8 taps.  Row (sublane) shift is a static ref-slice.
    acc = w_ref[0] * x_sh[0][:, 0:ho, :] + b_ref[0]
    for ki in range(KH):
        for kj in range(KW):
            if ki == 0 and kj == 0:
                continue
            acc = acc + w_ref[ki * KW + kj] * x_sh[kj][:, ki:ki + ho, :]

    o_ref[...] = acc.astype(o_ref.dtype)


def net_forward(x_nchw, weight, bias):
    """x_nchw: (N, 1, H, W); weight: (1, 1, 3, 3); bias: (1,).

    Returns (N, 1, H-2, W-2) f32, matching PyTorch's Conv2d(1,1,3)(x) + 1.
    """
    n, c, h, w = x_nchw.shape
    assert c == 1, "Net uses Conv2d(1, 1, 3): single input channel"
    ho, wo = h - (KH - 1), w - (KW - 1)

    # Lane-dense padded width (multiple of 128).
    wp = pl.cdiv(w, LANE) * LANE

    x_nhw = x_nchw.reshape(n, h, w).astype(jnp.float32)   # squeeze channel
    if wp != w:
        x_nhw = jnp.pad(x_nhw, ((0, 0), (0, 0), (0, wp - w)))

    # Batch tile: biggest TB whose double-buffered in+out blocks fit the budget.
    bytes_per_image = (h * wp + ho * wp) * 4 * 2           # in + out, x2 buffers
    tb = max(1, min(n, VMEM_BLOCK_BUDGET // bytes_per_image))
    n_pad = pl.cdiv(n, tb) * tb
    if n_pad != n:
        x_nhw = jnp.pad(x_nhw, ((0, n_pad - n), (0, 0), (0, 0)))
    grid = (n_pad // tb,)   # toy N=2 -> whole batch in a single grid step

    w_flat = weight.reshape(KH * KW).astype(jnp.float32)   # 1-D SMEM, no 2-D padding
    b1 = (bias.reshape(1) + 1.0).astype(jnp.float32)       # fold bias and the "+ 1"

    out_padded = pl.pallas_call(
        conv3x3_plus1_kernel,
        out_shape=jax.ShapeDtypeStruct((n_pad, ho, wp), jnp.float32),
        grid_spec=pltpu.PrefetchScalarGridSpec(
            num_scalar_prefetch=0,
            grid=grid,
            in_specs=[
                pl.BlockSpec(memory_space=pltpu.MemorySpace.SMEM),   # weight (9,)
                pl.BlockSpec(memory_space=pltpu.MemorySpace.SMEM),   # bias+1 (1,)
                pl.BlockSpec((tb, h, wp), lambda i: (i, 0, 0)),      # input tile
            ],
            out_specs=pl.BlockSpec((tb, ho, wp), lambda i: (i, 0, 0)),
        ),
        compiler_params=pltpu.CompilerParams(
            dimension_semantics=("parallel",),          # shards batch on v7x's 2 TCs
            vmem_limit_bytes=32 * 1024 * 1024,          # > v5e 16 MiB default, < v7x 64 MiB phys
        ),
    )(w_flat, b1, x_nhw)

    # Drop batch/width padding, re-insert the channel axis (NCHW API).
    out = out_padded[:n, :, :wo]
    return out.reshape(n, 1, ho, wo)


def _reference(x_nchw, weight, bias):
    """Pure-JAX reference (lax conv) for correctness check."""
    out = jax.lax.conv_general_dilated(
        x_nchw, weight, window_strides=(1, 1), padding="VALID",
        dimension_numbers=("NCHW", "OIHW", "NCHW"))
    return out + bias.reshape(1, -1, 1, 1) + 1.0


if __name__ == "__main__":
    key = jax.random.PRNGKey(0)
    k_x, k_w, k_b = jax.random.split(key, 3)

    # Small shapes consistent with the module: batch=2, channels=1, spatial=16
    N, C, H, W = 2, 1, 16, 16
    x = jax.random.normal(k_x, (N, C, H, W), dtype=jnp.float32)

    # Deterministic parameter init (shapes from nn.Conv2d(1, 1, 3)).
    weight = jax.random.normal(k_w, (1, 1, KH, KW), dtype=jnp.float32) * 0.2
    bias = jax.random.normal(k_b, (1,), dtype=jnp.float32) * 0.1

    out = net_forward(x, weight, bias)
    out = jax.block_until_ready(out)

    ref = jax.block_until_ready(_reference(x, weight, bias))
    assert out.shape == (N, 1, H - 2, W - 2), out.shape
    assert jnp.allclose(out, ref, atol=1e-5, rtol=1e-5), float(
        jnp.max(jnp.abs(out - ref)))

    print("KERNEL_OK")
</pallas_src>

<mosaic_0001>
module attributes {stable_mosaic.version = 11 : i64} {
  func.func @conv3x3_plus1_kernel(%arg0: i32, %arg1: memref<9xf32, #tpu.memory_space<smem>>, %arg2: memref<1xf32, #tpu.memory_space<smem>>, %arg3: memref<2x16x128xf32, #tpu.memory_space<vmem>>, %arg4: memref<2x14x128xf32, #tpu.memory_space<vmem>>) attributes {dimension_semantics = [#tpu.dimension_semantics<parallel>], iteration_bounds = array<i64: 1>, scalar_prefetch = 0 : i64, scratch_operands = 0 : i64, tpu.core_type = #tpu.core_type<tc>, window_params = [{transform_indices = @transform_0, window_bounds = array<i64: 9>}, {transform_indices = @transform_1, window_bounds = array<i64: 1>}, {transform_indices = @transform_2, window_bounds = array<i64: 2, 16, 128>}, {transform_indices = @transform_3, window_bounds = array<i64: 2, 14, 128>}]} {
    %c0 = arith.constant 0 : index
    %c0_0 = arith.constant 0 : index
    %c0_1 = arith.constant 0 : index
    %0 = vector.load %arg3[%c0, %c0_0, %c0_1] : memref<2x16x128xf32, #tpu.memory_space<vmem>>, vector<2x16x128xf32>
    %c127_i32 = arith.constant 127 : i32
    %1 = tpu.dynamic_rotate %0 by %c127_i32 dim 2 : vector<2x16x128xf32>, i32 -> vector<2x16x128xf32>
    %c126_i32 = arith.constant 126 : i32
    %2 = tpu.dynamic_rotate %0 by %c126_i32 dim 2 : vector<2x16x128xf32>, i32 -> vector<2x16x128xf32>
    %c0_2 = arith.constant 0 : index
    %3 = memref.load %arg1[%c0_2] : memref<9xf32, #tpu.memory_space<smem>>
    %4 = vector.extract_strided_slice %0 {offsets = [0, 0, 0], sizes = [2, 14, 128], strides = [1, 1, 1]} : vector<2x16x128xf32> to vector<2x14x128xf32>
    %5 = vector.broadcast %3 : f32 to vector<2x14x128xf32>
    %6 = arith.mulf %5, %4 : vector<2x14x128xf32>
    %c0_3 = arith.constant 0 : index
    %7 = memref.load %arg2[%c0_3] : memref<1xf32, #tpu.memory_space<smem>>
    %8 = vector.broadcast %7 : f32 to vector<2x14x128xf32>
    %9 = arith.addf %6, %8 : vector<2x14x128xf32>
    %c1 = arith.constant 1 : index
    %10 = memref.load %arg1[%c1] : memref<9xf32, #tpu.memory_space<smem>>
    %11 = vector.extract_strided_slice %1 {offsets = [0, 0, 0], sizes = [2, 14, 128], strides = [1, 1, 1]} : vector<2x16x128xf32> to vector<2x14x128xf32>
    %12 = vector.broadcast %10 : f32 to vector<2x14x128xf32>
    %13 = arith.mulf %12, %11 : vector<2x14x128xf32>
    %14 = arith.addf %9, %13 : vector<2x14x128xf32>
    %c2 = arith.constant 2 : index
    %15 = memref.load %arg1[%c2] : memref<9xf32, #tpu.memory_space<smem>>
    %16 = vector.extract_strided_slice %2 {offsets = [0, 0, 0], sizes = [2, 14, 128], strides = [1, 1, 1]} : vector<2x16x128xf32> to vector<2x14x128xf32>
    %17 = vector.broadcast %15 : f32 to vector<2x14x128xf32>
    %18 = arith.mulf %17, %16 : vector<2x14x128xf32>
    %19 = arith.addf %14, %18 : vector<2x14x128xf32>
    %c3 = arith.constant 3 : index
    %20 = memref.load %arg1[%c3] : memref<9xf32, #tpu.memory_space<smem>>
    %21 = vector.extract_strided_slice %0 {offsets = [0, 1, 0], sizes = [2, 14, 128], strides = [1, 1, 1]} : vector<2x16x128xf32> to vector<2x14x128xf32>
    %22 = vector.broadcast %20 : f32 to vector<2x14x128xf32>
    %23 = arith.mulf %22, %21 : vector<2x14x128xf32>
    %24 = arith.addf %19, %23 : vector<2x14x128xf32>
    %c4 = arith.constant 4 : index
    %25 = memref.load %arg1[%c4] : memref<9xf32, #tpu.memory_space<smem>>
    %26 = vector.extract_strided_slice %1 {offsets = [0, 1, 0], sizes = [2, 14, 128], strides = [1, 1, 1]} : vector<2x16x128xf32> to vector<2x14x128xf32>
    %27 = vector.broadcast %25 : f32 to vector<2x14x128xf32>
    %28 = arith.mulf %27, %26 : vector<2x14x128xf32>
    %29 = arith.addf %24, %28 : vector<2x14x128xf32>
    %c5 = arith.constant 5 : index
    %30 = memref.load %arg1[%c5] : memref<9xf32, #tpu.memory_space<smem>>
    %31 = vector.extract_strided_slice %2 {offsets = [0, 1, 0], sizes = [2, 14, 128], strides = [1, 1, 1]} : vector<2x16x128xf32> to vector<2x14x128xf32>
    %32 = vector.broadcast %30 : f32 to vector<2x14x128xf32>
    %33 = arith.mulf %32, %31 : vector<2x14x128xf32>
    %34 = arith.addf %29, %33 : vector<2x14x128xf32>
    %c6 = arith.constant 6 : index
    %35 = memref.load %arg1[%c6] : memref<9xf32, #tpu.memory_space<smem>>
    %36 = vector.extract_strided_slice %0 {offsets = [0, 2, 0], sizes = [2, 14, 128], strides = [1, 1, 1]} : vector<2x16x128xf32> to vector<2x14x128xf32>
    %37 = vector.broadcast %35 : f32 to vector<2x14x128xf32>
    %38 = arith.mulf %37, %36 : vector<2x14x128xf32>
    %39 = arith.addf %34, %38 : vector<2x14x128xf32>
    %c7 = arith.constant 7 : index
    %40 = memref.load %arg1[%c7] : memref<9xf32, #tpu.memory_space<smem>>
    %41 = vector.extract_strided_slice %1 {offsets = [0, 2, 0], sizes = [2, 14, 128], strides = [1, 1, 1]} : vector<2x16x128xf32> to vector<2x14x128xf32>
    %42 = vector.broadcast %40 : f32 to vector<2x14x128xf32>
    %43 = arith.mulf %42, %41 : vector<2x14x128xf32>
    %44 = arith.addf %39, %43 : vector<2x14x128xf32>
    %c8 = arith.constant 8 : index
    %45 = memref.load %arg1[%c8] : memref<9xf32, #tpu.memory_space<smem>>
    %46 = vector.extract_strided_slice %2 {offsets = [0, 2, 0], sizes = [2, 14, 128], strides = [1, 1, 1]} : vector<2x16x128xf32> to vector<2x14x128xf32>
    %47 = vector.broadcast %45 : f32 to vector<2x14x128xf32>
    %48 = arith.mulf %47, %46 : vector<2x14x128xf32>
    %49 = arith.addf %44, %48 : vector<2x14x128xf32>
    %c0_4 = arith.constant 0 : index
    %c0_5 = arith.constant 0 : index
    %c0_6 = arith.constant 0 : index
    %50 = vector.load %arg4[%c0_4, %c0_5, %c0_6] : memref<2x14x128xf32, #tpu.memory_space<vmem>>, vector<2x14x128xf32>
    tpu.vector_store %arg4[%c0_4, %c0_5, %c0_6], %49 {strides = array<i32>} : memref<2x14x128xf32, #tpu.memory_space<vmem>>, vector<2x14x128xf32>,
    return
  }
  func.func @transform_0(%arg0: i32) -> i32 {
    %c0_i32 = arith.constant 0 : i32
    %c0_i32_0 = arith.constant 0 : i32
    return %c0_i32 : i32
  }
  func.func @transform_1(%arg0: i32) -> i32 {
    %c0_i32 = arith.constant 0 : i32
    %c0_i32_0 = arith.constant 0 : i32
    return %c0_i32 : i32
  }
  func.func @transform_2(%arg0: i32) -> (i32, i32, i32) {
    %c0_i32 = arith.constant 0 : i32
    %c0_i32_0 = arith.constant 0 : i32
    %c0_i32_1 = arith.constant 0 : i32
    return %arg0, %c0_i32, %c0_i32_0 : i32, i32, i32
  }
  func.func @transform_3(%arg0: i32) -> (i32, i32, i32) {
    %c0_i32 = arith.constant 0 : i32
    %c0_i32_0 = arith.constant 0 : i32
    %c0_i32_1 = arith.constant 0 : i32
    return %arg0, %c0_i32, %c0_i32_0 : i32, i32, i32
  }
}

</mosaic_0001>

<llo_original>
// kernel: tpu_custom_call.1
$region0: #{tpu_custom_call.1}
  #allocation0 [shape = 'u32[]', space=smem, size = 0x4, offset = 0x4, fixed_abs, tag = 'smem constant byte address 0x4 - core index']
  #allocation1 [shape = 'u32[72,128]{1,0:T(1,128)}', space=vmem, size = 0x9000, scoped, tag = 'internal scratch']
  #allocation2 [shape = 'f32[1]{0:T(128)S(6)}', space=smem, size = 0x200, scoped, tag = 'scoped memory for tpu_custom_call.1']
  %s0 = inlined_call_operand.vmem [shape: f32[9], index: 0, kind: input, shape index: {}]
  %s1 = inlined_call_operand.<no memory space> [shape: f32[1], index: 1, kind: input, shape index: {}]
  %s2 = inlined_call_operand.hbm [shape: f32[2,16,128], index: 2, kind: input, shape index: {}]
  %s3 = inlined_call_operand.vmem [shape: f32[2,14,128], index: 3, kind: output, shape index: {}]
  %s4 = sld [smem:[#allocation0]]
  $region30: #{tpu_custom_call.1} parent=0
    _
  %s6 = ssub.s32 1, %s4
  %s7 = scalar_select 0, %s6, %s4
  %8 = sst [smem:[#allocation2]] %s1
  $region1: #{tpu_custom_call.1} parent=0
    #allocation3 [shape = 'u8[512]{0}', space=smem, size = 0x200, scoped, tag = 'input window, operand 0, single buffered']
    #allocation4 [shape = 's32[1]{0}', space=sflag, size = 0x4, scoped, tag = 'scoped memory for tpu_custom_call.1']
    #allocation5 [shape = 's32[1]{0}', space=sflag, size = 0x4, scoped, tag = 'scoped memory for tpu_custom_call.1']
    #allocation6 [shape = 'u8[16384]{0}', space=vmem, size = 0x4000, scoped, tag = 'input window, operand 2, single buffered']
    %9 = vsyncpa [#allocation5], 0
    %10 = vsyncpa [#allocation4], 0
    // Predicated region
    $region2: #{tpu_custom_call.1} parent=1 // pred_check
      _
    $region3: #{tpu_custom_call.1} parent=1 // pred_check_branch
      %12 = sbr.rel (0) target = $region5
    $region4: #{tpu_custom_call.1} parent=1 // pred_region
      %14 = vsyncadd [#allocation5], 0
      %s16 = sshll.u32 %s0, 4
      %s17 = int_to_ptr.vmem [resolvable:$true] %s16
      %19 = dma.vmem_to_smem %s17, 16, [#allocation3], [#allocation5]
    $region5: #{tpu_custom_call.1} parent=1 // pred_fallthru
      _
    // Predicated region
    $region6: #{tpu_custom_call.1} parent=1 // pred_check
      _
    $region7: #{tpu_custom_call.1} parent=1 // pred_check_branch
      %21 = sbr.rel (0) target = $region9
    $region8: #{tpu_custom_call.1} parent=1 // pred_region
      _
    $region9: #{tpu_custom_call.1} parent=1 // pred_fallthru
      _
    // Predicated region
    $region10: #{tpu_custom_call.1} parent=1 // pred_check
      _
    $region11: #{tpu_custom_call.1} parent=1 // pred_check_branch
      %23 = sbr.rel (0) target = $region13
    $region12: #{tpu_custom_call.1} parent=1 // pred_region
      %25 = vsyncadd [#allocation4], 0
      %s26 = sshll.u32 %s2, 4
      %s27 = int_to_ptr.hbm [resolvable:$true] %s26
      %s28 = sshll.u32 [#allocation6], 4
      %s29 = int_to_ptr.vmem [resolvable:$true] %s28
      %34 = dma.hbm_to_vmem [thread:$0]  %s27, 512, %s29, [#allocation4], 128, 128, 8
    $region13: #{tpu_custom_call.1} parent=1 // pred_fallthru
      _
    // Predicated region
    $region14: #{tpu_custom_call.1} parent=1 // pred_check
      _
    $region15: #{tpu_custom_call.1} parent=1 // pred_check_branch
      %36 = sbr.rel (0) target = $region17
    $region16: #{tpu_custom_call.1} parent=1 // pred_region
      %38 = dma.done [#allocation5], 16
    $region17: #{tpu_custom_call.1} parent=1 // pred_fallthru
      _
    // Predicated region
    $region18: #{tpu_custom_call.1} parent=1 // pred_check
      _
    $region19: #{tpu_custom_call.1} parent=1 // pred_check_branch
      %40 = sbr.rel (0) target = $region21
    $region20: #{tpu_custom_call.1} parent=1 // pred_region
      %42 = dma.done [#allocation4], 512
    $region21: #{tpu_custom_call.1} parent=1 // pred_fallthru
      _
    %43 = sfence
    %v44 = vld [vmem:[#allocation6] sm:$0xff]
    %v45 = vld [vmem:[#allocation6 + $0x8] sm:$0xff]
    %v46 = vld [vmem:[#allocation6 + $0x10] sm:$0xff]
    %v47 = vld [vmem:[#allocation6 + $0x18] sm:$0xff]
    %48 = vrot.lane.b32.xlu0 %v44, 127
    %v49 = vpop.permute.xlu0 %48
    %50 = vrot.lane.b32.xlu0 %v45, 127
    %v51 = vpop.permute.xlu0 %50
    %52 = vrot.lane.b32.xlu0 %v46, 127
    %v53 = vpop.permute.xlu0 %52
    %54 = vrot.lane.b32.xlu0 %v47, 127
    %v55 = vpop.permute.xlu0 %54
    %56 = vrot.lane.b32.xlu0 %v44, 126
    %v57 = vpop.permute.xlu0 %56
    %58 = vrot.lane.b32.xlu0 %v45, 126
    %v59 = vpop.permute.xlu0 %58
    %60 = vrot.lane.b32.xlu0 %v46, 126
    %v61 = vpop.permute.xlu0 %60
    %62 = vrot.lane.b32.xlu0 %v47, 126
    %v63 = vpop.permute.xlu0 %62
    %s64 = sld [smem:[#allocation3]]
    %v65 = vstv %s64
    %v66 = vmul.f32 %v65, %v44
    %v67 = vmul.f32 %v65, %v45
    %v68 = vmul.f32 %v65, %v46
    %v69 = vmul.f32 %v65, %v47
    %s70 = sld [smem:[#allocation2]]
    %v71 = vstv %s70
    %v72 = vadd.f32 %v66, %v71
    %v73 = vadd.f32 %v67, %v71
    %v74 = vadd.f32 %v68, %v71
    %v75 = vadd.f32 %v69, %v71
    %s76 = sld [smem:[#allocation3 + $0x1]]
    %v77 = vstv %s76
    %v78 = vmul.f32 %v77, %v49
    %v79 = vmul.f32 %v77, %v51
    %v80 = vmul.f32 %v77, %v53
    %v81 = vmul.f32 %v77, %v55
    %v82 = vadd.f32 %v72, %v78
    %v83 = vadd.f32 %v73, %v79
    %v84 = vadd.f32 %v74, %v80
    %v85 = vadd.f32 %v75, %v81
    %s86 = sld [smem:[#allocation3 + $0x2]]
    %v87 = vstv %s86
    %v88 = vmul.f32 %v87, %v57
    %v89 = vmul.f32 %v87, %v59
    %v90 = vmul.f32 %v87, %v61
    %v91 = vmul.f32 %v87, %v63
    %v92 = vadd.f32 %v82, %v88
    %v93 = vadd.f32 %v83, %v89
    %v94 = vadd.f32 %v84, %v90
    %v95 = vadd.f32 %v85, %v91
    %s96 = sld [smem:[#allocation3 + $0x3]]
    %v97 = vstv %s96
    %v98 = vmul.f32 %v97, %v44
    %v99 = vmul.f32 %v97, %v45
    %v100 = vmul.f32 %v97, %v46
    %v101 = vmul.f32 %v97, %v47
    %vm106 = vcmask 1046528
    %v107 = vrot.slane %v98, 1
    %v108 = vrot.slane %v99, 1
    %v109 = vsel %vm106, %v107, %v108
    %v110 = vrot.slane %v100, 1
    %v111 = vrot.slane %v101, 1
    %v112 = vsel %vm106, %v110, %v111
    %v117 = vadd.f32 %v92, %v109
    %v118 = vadd.f32 %v93, %v108
    %v119 = vadd.f32 %v94, %v112
    %v120 = vadd.f32 %v95, %v111
    %s121 = sld [smem:[#allocation3 + $0x4]]
    %v122 = vstv %s121
    %v123 = vmul.f32 %v122, %v49
    %v124 = vmul.f32 %v122, %v51
    %v125 = vmul.f32 %v122, %v53
    %v126 = vmul.f32 %v122, %v55
    %v131 = vrot.slane %v123, 1
    %v132 = vrot.slane %v124, 1
    %v133 = vsel %vm106, %v131, %v132
    %v134 = vrot.slane %v125, 1
    %v135 = vrot.slane %v126, 1
    %v136 = vsel %vm106, %v134, %v135
    %v141 = vadd.f32 %v117, %v133
    %v142 = vadd.f32 %v118, %v132
    %v143 = vadd.f32 %v119, %v136
    %v144 = vadd.f32 %v120, %v135
    %s145 = sld [smem:[#allocation3 + $0x5]]
    %v146 = vstv %s145
    %v147 = vmul.f32 %v146, %v57
    %v148 = vmul.f32 %v146, %v59
    %v149 = vmul.f32 %v146, %v61
    %v150 = vmul.f32 %v146, %v63
    %v155 = vrot.slane %v147, 1
    %v156 = vrot.slane %v148, 1
    %v157 = vsel %vm106, %v155, %v156
    %v158 = vrot.slane %v149, 1
    %v159 = vrot.slane %v150, 1
    %v160 = vsel %vm106, %v158, %v159
    %v165 = vadd.f32 %v141, %v157
    %v166 = vadd.f32 %v142, %v156
    %v167 = vadd.f32 %v143, %v160
    %v168 = vadd.f32 %v144, %v159
    %s169 = sld [smem:[#allocation3 + $0x6]]
    %v170 = vstv %s169
    %v171 = vmul.f32 %v170, %v44
    %v172 = vmul.f32 %v170, %v45
    %v173 = vmul.f32 %v170, %v46
    %v174 = vmul.f32 %v170, %v47
    %vm179 = vcmask 1045504
    %v180 = vrot.slane %v171, 2
    %v181 = vrot.slane %v172, 2
    %v182 = vsel %vm179, %v180, %v181
    %v183 = vrot.slane %v173, 2
    %v184 = vrot.slane %v174, 2
    %v185 = vsel %vm179, %v183, %v184
    %v190 = vadd.f32 %v165, %v182
    %v191 = vadd.f32 %v166, %v181
    %v192 = vadd.f32 %v167, %v185
    %v193 = vadd.f32 %v168, %v184
    %s194 = sld [smem:[#allocation3 + $0x7]]
    %v195 = vstv %s194
    %v196 = vmul.f32 %v195, %v49
    %v197 = vmul.f32 %v195, %v51
    %v198 = vmul.f32 %v195, %v53
    %v199 = vmul.f32 %v195, %v55
    %v204 = vrot.slane %v196, 2
    %v205 = vrot.slane %v197, 2
    %v206 = vsel %vm179, %v204, %v205
    %v207 = vrot.slane %v198, 2
    %v208 = vrot.slane %v199, 2
    %v209 = vsel %vm179, %v207, %v208
    %v214 = vadd.f32 %v190, %v206
    %v215 = vadd.f32 %v191, %v205
    %v216 = vadd.f32 %v192, %v209
    %v217 = vadd.f32 %v193, %v208
    %s218 = sld [smem:[#allocation3 + $0x8]]
    %v219 = vstv %s218
    %v220 = vmul.f32 %v219, %v57
    %v221 = vmul.f32 %v219, %v59
    %v222 = vmul.f32 %v219, %v61
    %v223 = vmul.f32 %v219, %v63
    %v228 = vrot.slane %v220, 2
    %v229 = vrot.slane %v221, 2
    %v230 = vsel %vm179, %v228, %v229
    %v231 = vrot.slane %v222, 2
    %v232 = vrot.slane %v223, 2
    %v233 = vsel %vm179, %v231, %v232
    %v238 = vadd.f32 %v214, %v230
    %v239 = vadd.f32 %v215, %v229
    %v240 = vadd.f32 %v216, %v233
    %v241 = vadd.f32 %v217, %v232
    %242 = vst [vmem:[%s3] sm:$0xff] %v238
    %243 = vst [vmem:[%s3 + $0x8] sm:$0x3f] %v239
    %244 = vst [vmem:[%s3 + $0x10] sm:$0xff] %v240
    %245 = vst [vmem:[%s3 + $0x18] sm:$0x3f] %v241
    // Predicated region
    $region22: #{tpu_custom_call.1} parent=1 // pred_check
      _
    $region23: #{tpu_custom_call.1} parent=1 // pred_check_branch
      %247 = sbr.rel (0) target = $region25
    $region24: #{tpu_custom_call.1} parent=1 // pred_region
      _
    $region25: #{tpu_custom_call.1} parent=1 // pred_fallthru
      _
    // Predicated region
    $region26: #{tpu_custom_call.1} parent=1 // pred_check
      _
    $region27: #{tpu_custom_call.1} parent=1 // pred_check_branch
      %249 = sbr.rel (0) target = $region29
    $region28: #{tpu_custom_call.1} parent=1 // pred_region
      _
    $region29: #{tpu_custom_call.1} parent=1 // pred_fallthru
      _
    %250 = vsyncpa [#allocation4], 1
    %251 = vsyncpa [#allocation5], 1

</llo_original>
